<compile_context>
chip_gen: v7x
topology: tpu7x:2x2x1
jax: 0.10.0
libtpu: 0.0.40
codegen_flags: <defaults>
</compile_context>

<pallas_src>
import math

import jax
import jax.numpy as jnp
from jax import lax
from jax.experimental import pallas as pl
from jax.experimental.pallas import tpu as pltpu


# --------------------------------------------------------------------------- #
# helpers
# --------------------------------------------------------------------------- #
def _round_up(x, m):
    return ((x + m - 1) // m) * m


def _pad_axis(x, multiple, axis):
    n = x.shape[axis]
    pad = (-n) % multiple
    if pad == 0:
        return x
    widths = [(0, 0)] * x.ndim
    widths[axis] = (0, pad)
    return jnp.pad(x, widths)


# --------------------------------------------------------------------------- #
# single-buffering probe for constant (index_map == (0,0)) operands
# --------------------------------------------------------------------------- #
_SINGLE_BUF_OK = None


def _single_buffer_supported():
    global _SINGLE_BUF_OK
    if _SINGLE_BUF_OK is not None:
        return _SINGLE_BUF_OK
    try:
        spec = pl.BlockSpec((8, 128), lambda i: (0, 0),
                            pipeline_mode=pl.Buffered(1))

        def k(x_ref, o_ref):
            o_ref[...] = x_ref[...] + 1.0

        y = pl.pallas_call(
            k,
            out_shape=jax.ShapeDtypeStruct((8, 128), jnp.float32),
            grid=(1,),
            in_specs=[spec],
            out_specs=pl.BlockSpec((8, 128), lambda i: (0, 0)),
        )(jnp.zeros((8, 128), jnp.float32))
        jax.block_until_ready(y)
        _SINGLE_BUF_OK = True
    except Exception:
        _SINGLE_BUF_OK = False
    return _SINGLE_BUF_OK


def _const_spec(shape):
    """BlockSpec for an operand whose block never changes across the grid."""
    index_map = lambda *_: tuple(0 for _ in shape)
    if _single_buffer_supported():
        return pl.BlockSpec(shape, index_map, pipeline_mode=pl.Buffered(1))
    return pl.BlockSpec(shape, index_map)


# --------------------------------------------------------------------------- #
# Pallas kernel: tiled pairwise squared distance (precomputed squared norms)
# --------------------------------------------------------------------------- #
def _sqdist_kernel(src_ref, dst_ref, s2_ref, d2_ref, out_ref):
    cross = lax.dot_general(src_ref[...], dst_ref[...],
                            (((1,), (1,)), ((), ())),
                            preferred_element_type=jnp.float32)
    out_ref[...] = s2_ref[...] - 2.0 * cross + d2_ref[...]


def pallas_square_distance(src, dst):
    """||src_i - dst_j||^2 -> [N, M]   (PyTorch square_distance, no clamp)."""
    N, C = src.shape
    M = dst.shape[0]
    src = src.astype(jnp.float32)
    dst = dst.astype(jnp.float32)
    s2 = jnp.sum(src * src, axis=1, keepdims=True)            # [N, 1]
    d2 = jnp.sum(dst * dst, axis=1, keepdims=True).T          # [1, M]

    TM = min(1024, _round_up(N, 8))
    TN = min(1024, _round_up(M, 128))                         # lane-dense output
    srcp = _pad_axis(src, TM, 0)
    s2p = _pad_axis(s2, TM, 0)
    dstp = _pad_axis(dst, TN, 0)
    d2p = _pad_axis(d2, TN, 1)
    Np, Mp = srcp.shape[0], dstp.shape[0]

    out = pl.pallas_call(
        _sqdist_kernel,
        out_shape=jax.ShapeDtypeStruct((Np, Mp), jnp.float32),
        grid=(Np // TM, Mp // TN),
        in_specs=[pl.BlockSpec((TM, C), lambda i, j: (i, 0)),
                  pl.BlockSpec((TN, C), lambda i, j: (j, 0)),
                  pl.BlockSpec((TM, 1), lambda i, j: (i, 0)),
                  pl.BlockSpec((1, TN), lambda i, j: (0, j))],
        out_specs=pl.BlockSpec((TM, TN), lambda i, j: (i, j)),
        compiler_params=pltpu.CompilerParams(
            dimension_semantics=("parallel", "parallel")),
    )(srcp, dstp, s2p, d2p)
    return out[:N, :M]


# --------------------------------------------------------------------------- #
# Pallas kernel: fused shared-MLP (chained 1x1 conv + bias + ReLU), optionally
# followed by a max-pool over groups of `ns` consecutive rows (SA stages).
# Input is f32 (unpadded channels), cast to bf16 in-register; output lane-dense.
# --------------------------------------------------------------------------- #
def _make_mlp_kernel(n_layers, ns=None):
    def kernel(x_ref, *refs):
        o_ref = refs[-1]
        h = x_ref[...].astype(jnp.bfloat16)
        for l in range(n_layers):
            w = refs[2 * l][...]                                # bf16 [cin_p, cout_p]
            b = refs[2 * l + 1][...]                            # f32  [1, cout_p]
            y = jnp.dot(h, w, preferred_element_type=jnp.float32) + b
            y = jnp.maximum(y, 0.0)
            h = y.astype(jnp.bfloat16) if (l + 1) < n_layers else y
        if ns is not None:
            R, C = h.shape
            h = jnp.max(h.reshape(R // ns, ns, C), axis=1)      # group max-pool
        o_ref[...] = h
    return kernel


def _fused_mlp_pallas(x2d, layers, ns=None):
    """relu(...relu(x @ w1 + b1)... @ wn + bn), optionally max over ns rows.

    x2d: [M, Cin] f32 (unpadded).  layers: list of dicts with pre-padded bf16
    "w" [cin_p, cout_p], f32 "b" [1, cout_p], int "cout".  BN (eval mode) is
    pre-folded into (w, b).  Returns [M, Cout] (ns=None) or [M//ns, Cout] f32.
    """
    M, Cin = x2d.shape
    n_layers = len(layers)
    wl = [l["w"] for l in layers]
    bl = [l["b"] for l in layers]
    Cout = layers[-1]["cout"]
    Cout_p = wl[-1].shape[1]
    max_cp = max(w.shape[1] for w in wl)
    x2d = x2d.astype(jnp.float32)

    bytes_w = sum(int(w.size) * 2 for w in wl) + sum(int(b.size) * 4 for b in bl)

    def vmem_est(tm, out_rows_tile):
        return (2 * tm * Cin * 4                     # double-buffered x tile (f32)
                + 2 * tm * max_cp * 4                # live f32 intermediates
                + 2 * out_rows_tile * Cout_p * 4     # double-buffered out tile
                + 2 * bytes_w)                       # weights (conservative x2)

    budget = 12 * 1024 * 1024                        # fits v5e(16M)/v7x(32M) scoped VMEM

    if ns is None:
        TM = _round_up(min(M, 128), 8)
        for cand in (1024, 512, 256, 128):
            tm = min(cand, _round_up(M, 8))
            if vmem_est(tm, tm) <= budget or cand == 128:
                TM = tm
                break
        xp = _pad_axis(x2d, TM, 0)
        Mp = xp.shape[0]
        out_rows, out_tile_rows = Mp, TM
    else:
        G = M // ns
        TG = min(8, G)
        for cand in (32, 16, 8):
            tg = min(cand, G)
            if vmem_est(tg * ns, tg) <= budget or cand == 8:
                TG = tg
                break
        TM = TG * ns
        xp = _pad_axis(x2d, TM, 0)
        Mp = xp.shape[0]
        out_rows, out_tile_rows = Mp // ns, TG
    n_tiles = Mp // TM

    in_specs = [pl.BlockSpec((TM, Cin), lambda i: (i, 0))]
    operands = [xp]
    for wp_, bp_ in zip(wl, bl):
        in_specs.append(_const_spec(wp_.shape))
        in_specs.append(_const_spec(bp_.shape))
        operands.extend([wp_, bp_])

    out = pl.pallas_call(
        _make_mlp_kernel(n_layers, ns=ns),
        out_shape=jax.ShapeDtypeStruct((out_rows, Cout_p), jnp.float32),
        grid=(n_tiles,),
        in_specs=in_specs,
        out_specs=pl.BlockSpec((out_tile_rows, Cout_p), lambda i: (i, 0)),
        compiler_params=pltpu.CompilerParams(dimension_semantics=("parallel",)),
    )(*operands)

    valid_rows = M if ns is None else M // ns
    return out[:valid_rows, :Cout]


# --------------------------------------------------------------------------- #
# head = conv1 (1x1) + InstanceNorm1d (eps=1e-5, no affine, biased var) + ReLU.
# Pass 1: row-tiled matmul emitting per-tile partial sum/sumsq (parallel,
#         megacore-friendly; no y round-trip to HBM).
# Pass 2: recompute the (tiny) matmul, normalize, ReLU (lane-dense output).
# --------------------------------------------------------------------------- #
def pallas_head(x, head_params, eps=1e-5):
    w = head_params["w"]          # [K, Cp] bf16 (pre-padded, lane-dense)
    b = head_params["b"]          # [1, Cp] f32
    C = head_params["cout"]
    N, K = x.shape
    Cp = w.shape[1]
    x = x.astype(jnp.float32)

    TM = min(2048, _round_up(N, 8))
    xp = _pad_axis(x, TM, 0)
    Np = xp.shape[0]
    n_tiles = Np // TM

    w_spec = _const_spec((K, Cp))
    b_spec = _const_spec((1, Cp))

    def stats_kernel(x_ref, w_ref, b_ref, st_ref):
        i = pl.program_id(0)
        xb = x_ref[...].astype(jnp.bfloat16)
        y = jnp.dot(xb, w_ref[...], preferred_element_type=jnp.float32) + b_ref[...]
        rows = lax.broadcasted_iota(jnp.int32, (TM, 1), 0) + i * TM
        ym = jnp.where(rows < N, y, 0.0)                        # mask padded rows
        ssum = jnp.sum(ym, axis=0, keepdims=True)               # [1, Cp]
        ssq = jnp.sum(ym * ym, axis=0, keepdims=True)           # [1, Cp]
        st_ref[...] = jnp.concatenate(
            [ssum, ssq, jnp.zeros((6, Cp), jnp.float32)], axis=0)

    stats = pl.pallas_call(
        stats_kernel,
        out_shape=jax.ShapeDtypeStruct((n_tiles * 8, Cp), jnp.float32),
        grid=(n_tiles,),
        in_specs=[pl.BlockSpec((TM, K), lambda i: (i, 0)), w_spec, b_spec],
        out_specs=pl.BlockSpec((8, Cp), lambda i: (i, 0)),
        compiler_params=pltpu.CompilerParams(dimension_semantics=("parallel",)),
    )(xp, w, b)

    stats = stats.reshape(n_tiles, 8, Cp)
    mean = jnp.sum(stats[:, 0, :], axis=0) / N
    var = jnp.maximum(jnp.sum(stats[:, 1, :], axis=0) / N - mean * mean, 0.0)
    rstd = lax.rsqrt(var + eps)
    mean2 = mean.reshape(1, Cp)
    rstd2 = rstd.reshape(1, Cp)

    def norm_kernel(x_ref, w_ref, b_ref, m_ref, r_ref, o_ref):
        xb = x_ref[...].astype(jnp.bfloat16)
        y = jnp.dot(xb, w_ref[...], preferred_element_type=jnp.float32) + b_ref[...]
        o_ref[...] = jnp.maximum((y - m_ref[...]) * r_ref[...], 0.0)

    out = pl.pallas_call(
        norm_kernel,
        out_shape=jax.ShapeDtypeStruct((Np, Cp), jnp.float32),
        grid=(n_tiles,),
        in_specs=[pl.BlockSpec((TM, K), lambda i: (i, 0)), w_spec, b_spec,
                  pl.BlockSpec((1, Cp), lambda i: (0, 0)),
                  pl.BlockSpec((1, Cp), lambda i: (0, 0))],
        out_specs=pl.BlockSpec((TM, Cp), lambda i: (i, 0)),
        compiler_params=pltpu.CompilerParams(dimension_semantics=("parallel",)),
    )(xp, w, b, mean2, rstd2)
    return out[:N, :C]


# --------------------------------------------------------------------------- #
# PointNet++ glue (data-dependent indexing kept in plain JAX)
# --------------------------------------------------------------------------- #
def farthest_point_sample_from_dists(dists, npoint):
    # TODO(synk): serial argmax loop kept in JAX; a resident-distance Pallas
    # FPS kernel would remove the per-iteration row gather at large N.
    N = dists.shape[0]

    def body(i, carry):
        centroids, distance, farthest = carry
        centroids = centroids.at[i].set(farthest)
        d = dists[farthest]
        distance = jnp.minimum(distance, d)
        farthest = jnp.argmax(distance).astype(jnp.int32)
        return centroids, distance, farthest

    init = (jnp.zeros((npoint,), jnp.int32),
            jnp.full((N,), 1e10, jnp.float32),
            jnp.int32(0))
    centroids, _, _ = lax.fori_loop(0, npoint, body, init)
    return centroids


def query_ball_point(radius, nsample, sqrdists):
    S, N = sqrdists.shape
    group_idx = jnp.broadcast_to(jnp.arange(N, dtype=jnp.int32), (S, N))
    group_idx = jnp.where(sqrdists > radius ** 2, N, group_idx)
    group_idx = jnp.sort(group_idx, axis=-1)[:, :nsample]
    group_first = group_idx[:, :1]
    group_idx = jnp.where(group_idx == N, group_first, group_idx)
    return group_idx


def set_abstraction(xyz, points, dists, radius, nsample, layer_params):
    """PointNetSetAbstraction (group_all=False), channels-last, fused MLP+max."""
    N = xyz.shape[0]
    # TODO(synk): exact npoint schedule of the custom SA layer is not in the
    # reference snippet (npoint is not a ctor arg); N // 2 downsampling assumed.
    npoint = max(N // 2, 1)
    ns = min(nsample, N)

    fps_idx = farthest_point_sample_from_dists(dists, npoint)     # [S]
    new_xyz = xyz[fps_idx]                                         # [S, 3]
    sqd = dists[fps_idx]                                           # [S, N]
    idx = query_ball_point(radius, ns, sqd)                        # [S, ns]

    grouped_xyz = xyz[idx] - new_xyz[:, None, :]                   # [S, ns, 3]
    grouped_points = points[idx]                                   # [S, ns, C]
    feat = jnp.concatenate([grouped_xyz, grouped_points], axis=-1)
    feat2d = feat.reshape(npoint * ns, feat.shape[-1]).astype(jnp.float32)

    # fused: all MLP layers + the nsample max-pool in ONE pallas_call
    new_points = _fused_mlp_pallas(feat2d, layer_params, ns=ns)    # [S, C_out]
    return new_xyz, new_points, fps_idx


def feature_propagation(points1, points2, fps_idx, dists_cur, layer_params):
    """PointNetFeaturePropagation with the level's distance matrix."""
    sub = dists_cur[:, fps_idx]                                    # [N, S]
    N, S = sub.shape
    if S == 1:
        interpolated = jnp.broadcast_to(points2, (N, points2.shape[-1]))
    else:
        k = min(3, S)
        neg_d, idx = lax.top_k(-sub, k)                            # 3 smallest dists
        d = -neg_d
        recip = 1.0 / (d + 1e-8)
        weight = recip / jnp.sum(recip, axis=-1, keepdims=True)
        interpolated = jnp.sum(points2[idx] * weight[..., None], axis=1)
    if points1 is not None:
        new_points = jnp.concatenate([points1, interpolated], axis=-1)
    else:
        new_points = interpolated
    # fused MLP chain in ONE pallas_call
    return _fused_mlp_pallas(new_points, layer_params, ns=None)


# --------------------------------------------------------------------------- #
# parameters: deterministic synthetic init; BN eval-mode with default running
# stats folded into the conv weights (scale 1/sqrt(1+1e-5)); weights pre-padded
# to lane-dense bf16 ONCE here (no per-forward rebuild).
# --------------------------------------------------------------------------- #
def _mlp_params(key, c_in, channels, fold_bn=True):
    layers = []
    c = c_in
    prev_p = c_in
    for c_out in channels:
        key, k1, k2 = jax.random.split(key, 3)
        w = jax.random.normal(k1, (c, c_out), jnp.float32) * (1.0 / math.sqrt(c))
        b = jax.random.normal(k2, (c_out,), jnp.float32) * 0.01
        if fold_bn:
            s = 1.0 / math.sqrt(1.0 + 1e-5)
            w, b = w * s, b * s
        cout_p = _round_up(c_out, 128)
        wp = jnp.zeros((prev_p, cout_p), jnp.bfloat16).at[:c, :c_out].set(
            w.astype(jnp.bfloat16))
        bp = jnp.zeros((1, cout_p), jnp.float32).at[:, :c_out].set(b)
        layers.append({"w": wp, "b": bp, "cout": c_out})
        c = c_out
        prev_p = cout_p
    return layers


def init_params(key, inchannels):
    ks = jax.random.split(key, 9)
    ic = inchannels
    p = {}
    p["sa1"] = _mlp_params(ks[0], 6 + 3, [ic, ic, ic * 2])
    p["sa2"] = _mlp_params(ks[1], ic * 2 + 3, [ic * 2, ic * 2, ic * 4])
    p["sa3"] = _mlp_params(ks[2], ic * 4 + 3, [ic * 4, ic * 4, ic * 8])
    p["sa4"] = _mlp_params(ks[3], ic * 8 + 3, [ic * 8, ic * 8, ic * 16])
    p["fp4"] = _mlp_params(ks[4], ic * 24, [ic * 12, ic * 8])
    p["fp3"] = _mlp_params(ks[5], ic * 12, [ic * 8, ic * 4])
    p["fp2"] = _mlp_params(ks[6], ic * 6, [ic * 4, ic * 2])
    p["fp1"] = _mlp_params(ks[7], ic * 2, [ic * 2, ic * 2, ic])
    p["head"] = _mlp_params(ks[8], ic, [ic], fold_bn=False)[0]
    return p


# --------------------------------------------------------------------------- #
# full model forward
# --------------------------------------------------------------------------- #
def get_model_forward(params, vertices_list, normals, istrain=False):
    verts = jnp.concatenate(vertices_list, axis=0)                 # [N, 3]
    mesh_id = jnp.concatenate(
        [jnp.full((v.shape[0],), i, jnp.int32) for i, v in enumerate(vertices_list)])

    def masked_dists(xyz, mid):
        # block-diagonal squared-distance matrix (1.0 across meshes), matching
        # the reference's get_dist / dists[fps_idx][:, fps_idx] semantics but
        # recomputed per level from the subsampled xyz (no NxN gathers).
        d = pallas_square_distance(xyz, xyz)
        same = mid[:, None] == mid[None, :]
        return jnp.where(same, d, 1.0)

    dists = masked_dists(verts, mesh_id)                           # [N, N]
    l0_xyz = verts
    l0_points = jnp.concatenate([verts, normals], axis=-1)         # [N, 6]

    l1_xyz, l1_points, fps_idx = set_abstraction(l0_xyz, l0_points, dists, 0.06, 32, params["sa1"])
    mesh_id1 = mesh_id[fps_idx]
    dists2 = masked_dists(l1_xyz, mesh_id1)
    l2_xyz, l2_points, fps_idx2 = set_abstraction(l1_xyz, l1_points, dists2, 0.10, 32, params["sa2"])
    mesh_id2 = mesh_id1[fps_idx2]
    dists3 = masked_dists(l2_xyz, mesh_id2)
    l3_xyz, l3_points, fps_idx3 = set_abstraction(l2_xyz, l2_points, dists3, 0.14, 32, params["sa3"])
    mesh_id3 = mesh_id2[fps_idx3]
    dists4 = masked_dists(l3_xyz, mesh_id3)
    l4_xyz, l4_points, fps_idx4 = set_abstraction(l3_xyz, l3_points, dists4, 0.18, 32, params["sa4"])

    l3_points = feature_propagation(l3_points, l4_points, fps_idx4, dists4, params["fp4"])
    l2_points = feature_propagation(l2_points, l3_points, fps_idx3, dists3, params["fp3"])
    l1_points = feature_propagation(l1_points, l2_points, fps_idx2, dists2, params["fp2"])
    l0_points = feature_propagation(None, l1_points, fps_idx, dists, params["fp1"])

    x = pallas_head(l0_points, params["head"])    # conv1 + InstanceNorm1d + ReLU
    # TODO(synk): Dropout(0.5) treated as identity (eval / istrain=False semantics).
    return x[None]                                # [1, N, inchannels] == permute(0, 2, 1)


# --------------------------------------------------------------------------- #
if __name__ == "__main__":
    key = jax.random.PRNGKey(0)
    kv1, kv2, kn, kp = jax.random.split(key, 4)

    n1, n2 = 32, 32                                # two small "meshes"
    vertices = [jax.random.uniform(kv1, (n1, 3), jnp.float32) * 0.2,
                jax.random.uniform(kv2, (n2, 3), jnp.float32) * 0.2]
    normals_raw = jax.random.normal(kn, (n1 + n2, 3), jnp.float32)
    normals = normals_raw / jnp.linalg.norm(normals_raw, axis=-1, keepdims=True)

    inchannels = 8                                 # small test width (default 64)
    params = init_params(kp, inchannels)

    out = get_model_forward(params, vertices, normals, istrain=False)
    out = jax.block_until_ready(out)

    assert out.shape == (1, n1 + n2, inchannels), out.shape
    assert bool(jnp.all(jnp.isfinite(out)))
    print("KERNEL_OK")
</pallas_src>

<mosaic_0001>
module attributes {stable_mosaic.version = 11 : i64} {
  func.func @_sqdist_kernel(%arg0: i32, %arg1: i32, %arg2: memref<64x3xf32, #tpu.memory_space<vmem>>, %arg3: memref<128x3xf32, #tpu.memory_space<vmem>>, %arg4: memref<64x1xf32, #tpu.memory_space<vmem>>, %arg5: memref<1x128xf32, #tpu.memory_space<vmem>>, %arg6: memref<64x128xf32, #tpu.memory_space<vmem>>) attributes {dimension_semantics = [#tpu.dimension_semantics<parallel>, #tpu.dimension_semantics<parallel>], iteration_bounds = array<i64: 1, 1>, scalar_prefetch = 0 : i64, scratch_operands = 0 : i64, tpu.core_type = #tpu.core_type<tc>, window_params = [{transform_indices = @transform_0, window_bounds = array<i64: 64, 3>}, {transform_indices = @transform_1, window_bounds = array<i64: 128, 3>}, {transform_indices = @transform_2, window_bounds = array<i64: 64, 1>}, {transform_indices = @transform_3, window_bounds = array<i64: 1, 128>}, {transform_indices = @transform_4, window_bounds = array<i64: 64, 128>}]} {
    %c0 = arith.constant 0 : index
    %c0_0 = arith.constant 0 : index
    %0 = vector.load %arg2[%c0, %c0_0] : memref<64x3xf32, #tpu.memory_space<vmem>>, vector<64x3xf32>
    %c0_1 = arith.constant 0 : index
    %c0_2 = arith.constant 0 : index
    %1 = vector.load %arg3[%c0_1, %c0_2] : memref<128x3xf32, #tpu.memory_space<vmem>>, vector<128x3xf32>
    %cst = arith.constant dense<0.000000e+00> : vector<64x128xf32>
    %2 = tpu.matmul %0, %1, %cst {dimension_numbers = #tpu.dot_dimension_numbers<[1], [1], [0], [0], [0, 0, 1, 0], [], []>} : vector<64x3xf32>, vector<128x3xf32>, vector<64x128xf32> -> vector<64x128xf32>
    %c0_3 = arith.constant 0 : index
    %c0_4 = arith.constant 0 : index
    %3 = vector.load %arg4[%c0_3, %c0_4] : memref<64x1xf32, #tpu.memory_space<vmem>>, vector<64x1xf32>
    %cst_5 = arith.constant 2.000000e+00 : f32
    %4 = vector.broadcast %cst_5 : f32 to vector<64x128xf32>
    %5 = arith.mulf %4, %2 : vector<64x128xf32>
    %6 = vector.broadcast %3 : vector<64x1xf32> to vector<64x128xf32>
    %7 = arith.subf %6, %5 : vector<64x128xf32>
    %c0_6 = arith.constant 0 : index
    %c0_7 = arith.constant 0 : index
    %8 = vector.load %arg5[%c0_6, %c0_7] : memref<1x128xf32, #tpu.memory_space<vmem>>, vector<1x128xf32>
    %9 = vector.broadcast %8 : vector<1x128xf32> to vector<64x128xf32>
    %10 = arith.addf %7, %9 : vector<64x128xf32>
    %c0_8 = arith.constant 0 : index
    %c0_9 = arith.constant 0 : index
    %11 = vector.load %arg6[%c0_8, %c0_9] : memref<64x128xf32, #tpu.memory_space<vmem>>, vector<64x128xf32>
    tpu.vector_store %arg6[%c0_8, %c0_9], %10 {strides = array<i32>} : memref<64x128xf32, #tpu.memory_space<vmem>>, vector<64x128xf32>,
    return
  }
  func.func @transform_0(%arg0: i32, %arg1: i32) -> (i32, i32) {
    %c0_i32 = arith.constant 0 : i32
    %c0_i32_0 = arith.constant 0 : i32
    return %arg0, %c0_i32 : i32, i32
  }
  func.func @transform_1(%arg0: i32, %arg1: i32) -> (i32, i32) {
    %c0_i32 = arith.constant 0 : i32
    %c0_i32_0 = arith.constant 0 : i32
    return %arg1, %c0_i32 : i32, i32
  }
  func.func @transform_2(%arg0: i32, %arg1: i32) -> (i32, i32) {
    %c0_i32 = arith.constant 0 : i32
    %c0_i32_0 = arith.constant 0 : i32
    return %arg0, %c0_i32 : i32, i32
  }
  func.func @transform_3(%arg0: i32, %arg1: i32) -> (i32, i32) {
    %c0_i32 = arith.constant 0 : i32
    %c0_i32_0 = arith.constant 0 : i32
    return %c0_i32, %arg1 : i32, i32
  }
  func.func @transform_4(%arg0: i32, %arg1: i32) -> (i32, i32) {
    %c0_i32 = arith.constant 0 : i32
    return %arg0, %arg1 : i32, i32
  }
}

</mosaic_0001>

<llo_original>
// kernel: tpu_custom_call.1
$region0: #{tpu_custom_call.1}
  #allocation0 [shape = 'u32[]', space=smem, size = 0x4, offset = 0x4, fixed_abs, tag = 'smem constant byte address 0x4 - core index']
  #allocation1 [shape = 'u32[144,128]{1,0:T(1,128)}', space=vmem, size = 0x12000, scoped, tag = 'internal scratch']
  %s0 = inlined_call_operand.vmem [shape: f32[64,3], index: 0, kind: input, shape index: {}]
  %s1 = inlined_call_operand.vmem [shape: f32[128,3], index: 1, kind: input, shape index: {}]
  %s2 = inlined_call_operand.vmem [shape: f32[64,1], index: 2, kind: input, shape index: {}]
  %s3 = inlined_call_operand.vmem [shape: f32[1,128], index: 3, kind: input, shape index: {}]
  %s4 = inlined_call_operand.hbm [shape: f32[64,128], index: 4, kind: output, shape index: {}]
  %s5 = sld [smem:[#allocation0]]
  $region26: #{tpu_custom_call.1} parent=0
    _
  %s7 = ssub.s32 1, %s5
  %s8 = scalar_select 0, %s7, %s5
  $region1: #{tpu_custom_call.1} parent=0
    #allocation2 [shape = 'u8[32768]{0}', space=vmem, size = 0x8000, scoped, tag = 'output window, operand 0, single buffered']
    #allocation3 [shape = 's32[1]{0}', space=sflag, size = 0x4, scoped, tag = 'scoped memory for tpu_custom_call.1']
    %9 = vsyncpa [#allocation3], 0
    // Predicated region
    $region2: #{tpu_custom_call.1} parent=1 // pred_check
      _
    $region3: #{tpu_custom_call.1} parent=1 // pred_check_branch
      %11 = sbr.rel (0) target = $region5
    $region4: #{tpu_custom_call.1} parent=1 // pred_region
      _
    $region5: #{tpu_custom_call.1} parent=1 // pred_fallthru
      _
    // Predicated region
    $region6: #{tpu_custom_call.1} parent=1 // pred_check
      _
    $region7: #{tpu_custom_call.1} parent=1 // pred_check_branch
      %13 = sbr.rel (0) target = $region9
    $region8: #{tpu_custom_call.1} parent=1 // pred_region
      _
    $region9: #{tpu_custom_call.1} parent=1 // pred_fallthru
      _
    // Predicated region
    $region10: #{tpu_custom_call.1} parent=1 // pred_check
      _
    $region11: #{tpu_custom_call.1} parent=1 // pred_check_branch
      %15 = sbr.rel (0) target = $region13
    $region12: #{tpu_custom_call.1} parent=1 // pred_region
      _
    $region13: #{tpu_custom_call.1} parent=1 // pred_fallthru
      _
    // Predicated region
    $region14: #{tpu_custom_call.1} parent=1 // pred_check
      _
    $region15: #{tpu_custom_call.1} parent=1 // pred_check_branch
      %17 = sbr.rel (0) target = $region17
    $region16: #{tpu_custom_call.1} parent=1 // pred_region
      _
    $region17: #{tpu_custom_call.1} parent=1 // pred_fallthru
      _
    %v18 = vld [vmem:[%s0] sm:$0xff]
    %v19 = vld [vmem:[%s0 + $0x8] sm:$0xff]
    %v20 = vld [vmem:[%s0 + $0x10] sm:$0xff]
    %v21 = vld [vmem:[%s0 + $0x18] sm:$0xff]
    %v22 = vld [vmem:[%s0 + $0x20] sm:$0xff]
    %v23 = vld [vmem:[%s0 + $0x28] sm:$0xff]
    %v24 = vld [vmem:[%s0 + $0x30] sm:$0xff]
    %v25 = vld [vmem:[%s0 + $0x38] sm:$0xff]
    %v26 = vld [vmem:[%s1] sm:$0xff]
    %v27 = vld [vmem:[%s1 + $0x8] sm:$0xff]
    %v28 = vld [vmem:[%s1 + $0x10] sm:$0xff]
    %v29 = vld [vmem:[%s1 + $0x18] sm:$0xff]
    %v30 = vld [vmem:[%s1 + $0x20] sm:$0xff]
    %v31 = vld [vmem:[%s1 + $0x28] sm:$0xff]
    %v32 = vld [vmem:[%s1 + $0x30] sm:$0xff]
    %v33 = vld [vmem:[%s1 + $0x38] sm:$0xff]
    %v34 = vld [vmem:[%s1 + $0x40] sm:$0xff]
    %v35 = vld [vmem:[%s1 + $0x48] sm:$0xff]
    %v36 = vld [vmem:[%s1 + $0x50] sm:$0xff]
    %v37 = vld [vmem:[%s1 + $0x58] sm:$0xff]
    %v38 = vld [vmem:[%s1 + $0x60] sm:$0xff]
    %v39 = vld [vmem:[%s1 + $0x68] sm:$0xff]
    %v40 = vld [vmem:[%s1 + $0x70] sm:$0xff]
    %v41 = vld [vmem:[%s1 + $0x78] sm:$0xff]
    %vm42 = vcmask 23552
    %v44 = vsel %vm42, %v18, 0
    %v47 = vsel %vm42, %v19, 0
    %v50 = vsel %vm42, %v20, 0
    %v53 = vsel %vm42, %v21, 0
    %v56 = vsel %vm42, %v22, 0
    %v59 = vsel %vm42, %v23, 0
    %v62 = vsel %vm42, %v24, 0
    %v65 = vsel %vm42, %v25, 0
    %v68 = vsel %vm42, %v26, 0
    %v71 = vsel %vm42, %v27, 0
    %v74 = vsel %vm42, %v28, 0
    %v77 = vsel %vm42, %v29, 0
    %v80 = vsel %vm42, %v30, 0
    %v83 = vsel %vm42, %v31, 0
    %v86 = vsel %vm42, %v32, 0
    %v89 = vsel %vm42, %v33, 0
    %v92 = vsel %vm42, %v34, 0
    %v95 = vsel %vm42, %v35, 0
    %v98 = vsel %vm42, %v36, 0
    %v101 = vsel %vm42, %v37, 0
    %v104 = vsel %vm42, %v38, 0
    %v107 = vsel %vm42, %v39, 0
    %v110 = vsel %vm42, %v40, 0
    %v113 = vsel %vm42, %v41, 0
    %115 = vmatprep.subr.mxu0 0.0
    %116 = vmatpush1.xpose.msra.mxu0 %v68
    %117 = vmatprep.subr.mxu0 0.0
    %118 = vmatpush1.xpose.msra.mxu0 %v71
    %119 = vmatprep.subr.mxu0 0.0
    %120 = vmatpush1.xpose.msra.mxu0 %v74
    %121 = vmatprep.subr.mxu0 0.0
    %122 = vmatpush1.xpose.msra.mxu0 %v77
    %123 = vmatprep.subr.mxu0 0.0
    %124 = vmatpush1.xpose.msra.mxu0 %v80
    %125 = vmatprep.subr.mxu0 0.0
    %126 = vmatpush1.xpose.msra.mxu0 %v83
    %127 = vmatprep.subr.mxu0 0.0
    %128 = vmatpush1.xpose.msra.mxu0 %v86
    %129 = vmatprep.subr.mxu0 0.0
    %130 = vmatpush1.xpose.msra.mxu0 %v89
    %131 = vmatprep.subr.mxu0 0.0
    %132 = vmatpush1.xpose.msra.mxu0 %v92
    %133 = vmatprep.subr.mxu0 0.0
    %134 = vmatpush1.xpose.msra.mxu0 %v95
    %135 = vmatprep.subr.mxu0 0.0
    %136 = vmatpush1.xpose.msra.mxu0 %v98
    %137 = vmatprep.subr.mxu0 0.0
    %138 = vmatpush1.xpose.msra.mxu0 %v101
    %139 = vmatprep.subr.mxu0 0.0
    %140 = vmatpush1.xpose.msra.mxu0 %v104
    %141 = vmatprep.subr.mxu0 0.0
    %142 = vmatpush1.xpose.msra.mxu0 %v107
    %143 = vmatprep.subr.mxu0 0.0
    %144 = vmatpush1.xpose.msra.mxu0 %v110
    %145 = vmatprep.subr.mxu0 0.0
    %146 = vmatpush1.xpose.msra.mxu0 %v113
    %147 = vmatprep.subr.mxu0 0.0
    %148 = vmatpush1.xpose.msra.mxu0 0.0
    %149 = vmatprep.subr.mxu0 0.0
    %150 = vmatpush1.xpose.msra.mxu0 0.0
    %151 = vmatprep.subr.mxu0 0.0
    %152 = vmatpush1.xpose.msra.mxu0 0.0
    %153 = vmatprep.subr.mxu0 0.0
    %154 = vmatpush1.xpose.msra.mxu0 0.0
    %155 = vmatprep.subr.mxu0 0.0
    %156 = vmatpush1.xpose.msra.mxu0 0.0
    %157 = vmatprep.subr.mxu0 0.0
    %158 = vmatpush1.xpose.msra.mxu0 0.0
    %159 = vmatprep.subr.mxu0 0.0
    %160 = vmatpush1.xpose.msra.mxu0 0.0
    %161 = vmatprep.subr.mxu0 0.0
    %162 = vmatpush1.xpose.msra.mxu0 0.0
    %163 = vmatprep.subr.mxu0 0.0
    %164 = vmatpush1.xpose.msra.mxu0 0.0
    %165 = vmatprep.subr.mxu0 0.0
    %166 = vmatpush1.xpose.msra.mxu0 0.0
    %167 = vmatprep.subr.mxu0 0.0
    %168 = vmatpush1.xpose.msra.mxu0 0.0
    %169 = vmatprep.subr.mxu0 0.0
    %170 = vmatpush1.xpose.msra.mxu0 0.0
    %171 = vmatprep.subr.mxu0 0.0
    %172 = vmatpush1.xpose.msra.mxu0 0.0
    %173 = vmatprep.subr.mxu0 0.0
    %174 = vmatpush1.xpose.msra.mxu0 0.0
    %175 = vmatprep.subr.mxu0 0.0
    %176 = vmatpush1.xpose.msra.mxu0 0.0
    %177 = vmatprep.subr.mxu0 0.0
    %178 = vmatpush1.xpose.msra.mxu0 0.0
    %179 = vmatprep.mubr.f32.mxu0 0.0
    %180 = vmatmul.mubr.f32.gmra.mrb[0].mxu0 %v44
    %v181 = vpop.f32.mrb[0].mxu0
    %v182 = vadd.f32 0.0, %v181
    %v183 = vpop.f32.mrb[0].mxu0
    %184 = vmatprep.mubr.f32.mxu0 0.0
    %185 = vmatmul.mubr.f32.gmra.mrb[0].mxu0 %v47
    %v186 = vpop.f32.mrb[0].mxu0
    %v187 = vadd.f32 0.0, %v186
    %v188 = vpop.f32.mrb[0].mxu0
    %189 = vmatprep.mubr.f32.mxu0 0.0
    %190 = vmatmul.mubr.f32.gmra.mrb[0].mxu0 %v50
    %v191 = vpop.f32.mrb[0].mxu0
    %v192 = vadd.f32 0.0, %v191
    %v193 = vpop.f32.mrb[0].mxu0
    %194 = vmatprep.mubr.f32.mxu0 0.0
    %195 = vmatmul.mubr.f32.gmra.mrb[0].mxu0 %v53
    %v196 = vpop.f32.mrb[0].mxu0
    %v197 = vadd.f32 0.0, %v196
    %v198 = vpop.f32.mrb[0].mxu0
    %199 = vmatprep.mubr.f32.mxu0 0.0
    %200 = vmatmul.mubr.f32.gmra.mrb[0].mxu0 %v56
    %v201 = vpop.f32.mrb[0].mxu0
    %v202 = vadd.f32 0.0, %v201
    %v203 = vpop.f32.mrb[0].mxu0
    %204 = vmatprep.mubr.f32.mxu0 0.0
    %205 = vmatmul.mubr.f32.gmra.mrb[0].mxu0 %v59
    %v206 = vpop.f32.mrb[0].mxu0
    %v207 = vadd.f32 0.0, %v206
    %v208 = vpop.f32.mrb[0].mxu0
    %209 = vmatprep.mubr.f32.mxu0 0.0
    %210 = vmatmul.mubr.f32.gmra.mrb[0].mxu0 %v62
    %v211 = vpop.f32.mrb[0].mxu0
    %v212 = vadd.f32 0.0, %v211
    %v213 = vpop.f32.mrb[0].mxu0
    %214 = vmatprep.mubr.f32.mxu0 0.0
    %215 = vmatmul.mubr.f32.gmra.mrb[0].mxu0 %v65
    %v216 = vpop.f32.mrb[0].mxu0
    %v217 = vadd.f32 0.0, %v216
    %v218 = vpop.f32.mrb[0].mxu0
    %219 = vdwg.mxu0
    %v220 = vld [vmem:[%s2] sm:$0xff]
    %v221 = vld [vmem:[%s2 + $0x8] sm:$0xff]
    %v222 = vld [vmem:[%s2 + $0x10] sm:$0xff]
    %v223 = vld [vmem:[%s2 + $0x18] sm:$0xff]
    %v224 = vld [vmem:[%s2 + $0x20] sm:$0xff]
    %v225 = vld [vmem:[%s2 + $0x28] sm:$0xff]
    %v226 = vld [vmem:[%s2 + $0x30] sm:$0xff]
    %v227 = vld [vmem:[%s2 + $0x38] sm:$0xff]
    %v228 = vmul.f32 %v182, 2.0
    %v229 = vmul.f32 %v187, 2.0
    %v230 = vmul.f32 %v192, 2.0
    %v231 = vmul.f32 %v197, 2.0
    %v232 = vmul.f32 %v202, 2.0
    %v233 = vmul.f32 %v207, 2.0
    %v234 = vmul.f32 %v212, 2.0
    %v235 = vmul.f32 %v217, 2.0
    %237 = vset.pattern.permute.xlu0 0
    %238 = vperm.xlu0 %237, %v220
    %v239 = vpop.permute.xlu0 %238
    %242 = vset.pattern.permute.xlu0 0
    %243 = vperm.xlu0 %242, %v221
    %v244 = vpop.permute.xlu0 %243
    %247 = vset.pattern.permute.xlu0 0
    %248 = vperm.xlu0 %247, %v222
    %v249 = vpop.permute.xlu0 %248
    %252 = vset.pattern.permute.xlu0 0
    %253 = vperm.xlu0 %252, %v223
    %v254 = vpop.permute.xlu0 %253
    %257 = vset.pattern.permute.xlu0 0
    %258 = vperm.xlu0 %257, %v224
    %v259 = vpop.permute.xlu0 %258
    %262 = vset.pattern.permute.xlu0 0
    %263 = vperm.xlu0 %262, %v225
    %v264 = vpop.permute.xlu0 %263
    %267 = vset.pattern.permute.xlu0 0
    %268 = vperm.xlu0 %267, %v226
    %v269 = vpop.permute.xlu0 %268
    %272 = vset.pattern.permute.xlu0 0
    %273 = vperm.xlu0 %272, %v227
    %v274 = vpop.permute.xlu0 %273
    %v276 = vsub.f32 %v239, %v228
    %v277 = vsub.f32 %v244, %v229
    %v278 = vsub.f32 %v249, %v230
    %v279 = vsub.f32 %v254, %v231
    %v280 = vsub.f32 %v259, %v232
    %v281 = vsub.f32 %v264, %v233
    %v282 = vsub.f32 %v269, %v234
    %v283 = vsub.f32 %v274, %v235
    %v284 = vld [vmem:[%s3] sm:$0x1]
    %v286 = vlaneseq
    %v287 = vshrl.u32 %v286, 7
    %v288 = vsub.s32 0, %v287
    %v289 = vrot.slane %v284, %v288
    %v291 = vadd.f32 %v276, %v289
    %v292 = vadd.f32 %v277, %v289
    %v293 = vadd.f32 %v278, %v289
    %v294 = vadd.f32 %v279, %v289
    %v295 = vadd.f32 %v280, %v289
    %v296 = vadd.f32 %v281, %v289
    %v297 = vadd.f32 %v282, %v289
    %v298 = vadd.f32 %v283, %v289
    %299 = vst [vmem:[#allocation2] sm:$0xff] %v291
    %300 = vst [vmem:[#allocation2 + $0x8] sm:$0xff] %v292
    %301 = vst [vmem:[#allocation2 + $0x10] sm:$0xff] %v293
    %302 = vst [vmem:[#allocation2 + $0x18] sm:$0xff] %v294
    %303 = vst [vmem:[#allocation2 + $0x20] sm:$0xff] %v295
    %304 = vst [vmem:[#allocation2 + $0x28] sm:$0xff] %v296
    %305 = vst [vmem:[#allocation2 + $0x30] sm:$0xff] %v297
    %306 = vst [vmem:[#allocation2 + $0x38] sm:$0xff] %v298
    // Predicated region
    $region18: #{tpu_custom_call.1} parent=1 // pred_check
      _
    $region19: #{tpu_custom_call.1} parent=1 // pred_check_branch
      %308 = sbr.rel (0) target = $region21
    $region20: #{tpu_custom_call.1} parent=1 // pred_region
      %s310 = ssub.s32 1024, 1024
      %311 = vsyncadd [#allocation3], %s310
      %s312 = sshll.u32 [#allocation2], 4
      %s313 = int_to_ptr.vmem [resolvable:$true] %s312
      %318 = dma.vmem_to_hbm [thread:$0]  %s313, 1024, %s4, [#allocation3], 128, 128, 8
    $region21: #{tpu_custom_call.1} parent=1 // pred_fallthru
      _
    // Predicated region
    $region22: #{tpu_custom_call.1} parent=1 // pred_check
      _
    $region23: #{tpu_custom_call.1} parent=1 // pred_check_branch
      %320 = sbr.rel (0) target = $region25
    $region24: #{tpu_custom_call.1} parent=1 // pred_region
      %321 = dma.done [#allocation3], 1024
    $region25: #{tpu_custom_call.1} parent=1 // pred_fallthru
      _
    %322 = vsyncpa [#allocation3], 1

</llo_original>
